<compile_context>
chip_gen: v7x
topology: tpu7x:2x2x1
jax: 0.10.0
libtpu: 0.0.40
codegen_flags: <defaults>
</compile_context>

<pallas_src>
import functools

import jax
import jax.numpy as jnp
from jax import lax
from jax.experimental import pallas as pl
from jax.experimental.pallas import tpu as pltpu


def _layernorm_kernel(x_ref, g_ref, b_ref, o_ref, *, eps, m, m_padded):
    # x_ref: (TB, Mp) tile of flattened samples; g_ref/b_ref: (1, Mp) slabs.
    x = x_ref[...].astype(jnp.float32)

    # Pass 1: per-sample mean (padded columns are zero -> plain sum is exact).
    s1 = jnp.sum(x, axis=1, keepdims=True)              # (TB, 1)
    mean = s1 * (1.0 / m)                                # (TB, 1)

    centered = x - mean                                  # (TB, Mp)

    # Pass 2: unbiased variance over the valid columns only.  Two-pass form
    # avoids the E[x^2]-E[x]^2 cancellation and is non-negative by
    # construction; the extra VPU pass hides under the HBM-bound DMA.
    if m_padded != m:
        lane = lax.broadcasted_iota(jnp.int32, x.shape, 1)
        centered_v = jnp.where(lane < m, centered, 0.0)
    else:
        centered_v = centered
    var = jnp.sum(centered_v * centered_v, axis=1, keepdims=True) * (1.0 / (m - 1))
    var = jnp.maximum(var, 0.0)                          # paranoia; (TB,1) only
    std = jnp.sqrt(var)

    # Full-precision divide on a (TB, 1) vector (approx=False is NOT the EUP
    # vrcp fast path; per-row scalar work, not a perf lever either way).
    inv = pl.reciprocal(std + eps, approx=False)         # (TB, 1)

    g = g_ref[...].astype(jnp.float32)                   # (1, Mp)
    b = b_ref[...].astype(jnp.float32)                   # (1, Mp)

    # ((x - mean) * inv) * g + b : no (TB, Mp) `scale` intermediate.
    o_ref[...] = ((centered * inv) * g + b).astype(o_ref.dtype)


def layer_norm(x, gamma, beta, eps=1e-5):
    """x: (N, C, H, W); gamma, beta: (C,). Matches the PyTorch module."""
    N, C, H, W = x.shape
    M = C * H * W
    assert M > 1, "need more than one element per sample for unbiased std"

    # Lane-dense flat layout: (N, M) with M on the lane axis, padded to a
    # multiple of 128 lanes so stores are unmasked full-vreg vst.
    Mp = ((M + 127) // 128) * 128
    x_flat = x.reshape(N, M)

    # Pre-broadcast per-channel affine params to lane-dense (1, M) slabs.
    g = jnp.broadcast_to(
        gamma.astype(jnp.float32).reshape(C, 1), (C, H * W)
    ).reshape(1, M)
    b = jnp.broadcast_to(
        beta.astype(jnp.float32).reshape(C, 1), (C, H * W)
    ).reshape(1, M)

    if Mp != M:
        x_flat = jnp.pad(x_flat, ((0, 0), (0, Mp - M)))
        g = jnp.pad(g, ((0, 0), (0, Mp - M)))
        b = jnp.pad(b, ((0, 0), (0, Mp - M)))

    # Fixed row-block: <= ~4 MiB f32 x-tile, <= 512 rows, always a multiple of
    # the 8-sublane f32 pack (full (8,128) vreg occupancy).  Batch is padded up
    # to grid*tb; padded rows are independent garbage and sliced off below.
    bytes_per_row = Mp * 4
    tb_cap = max(8, (((4 * 1024 * 1024) // bytes_per_row) // 8) * 8)
    tb = min(512, tb_cap)
    n_pad8 = ((N + 7) // 8) * 8
    tb = min(tb, n_pad8)                       # small batches -> single block
    grid_n = pl.cdiv(N, tb)
    Np = grid_n * tb
    if Np != N:
        x_flat = jnp.pad(x_flat, ((0, Np - N), (0, 0)))
    # On v7x, grid_n >= 2 (for any non-tiny N) lets dimension_semantics
    # shard row-blocks across both TensorCores.

    kernel = functools.partial(_layernorm_kernel, eps=float(eps), m=M, m_padded=Mp)

    itemsize = jnp.dtype(x.dtype).itemsize
    cost = pl.CostEstimate(
        flops=8 * N * M,
        transcendentals=2 * N,
        bytes_accessed=2 * N * M * itemsize + 2 * M * 4,
    )

    out_flat = pl.pallas_call(
        kernel,
        out_shape=jax.ShapeDtypeStruct((Np, Mp), x.dtype),
        grid_spec=pltpu.PrefetchScalarGridSpec(
            num_scalar_prefetch=0,
            grid=(grid_n,),
            in_specs=[
                pl.BlockSpec((tb, Mp), lambda i: (i, 0)),
                pl.BlockSpec((1, Mp), lambda i: (0, 0)),   # resident gamma slab
                pl.BlockSpec((1, Mp), lambda i: (0, 0)),   # resident beta slab
            ],
            out_specs=pl.BlockSpec((tb, Mp), lambda i: (i, 0)),
        ),
        compiler_params=pltpu.CompilerParams(
            dimension_semantics=("parallel",),
            vmem_limit_bytes=32 * 1024 * 1024,
        ),
        cost_estimate=cost,
    )(x_flat, g, b)

    return out_flat[:N, :M].reshape(N, C, H, W)


def layer_norm_ref(x, gamma, beta, eps=1e-5):
    """Pure-JAX reference matching the PyTorch module semantics."""
    N = x.shape[0]
    xf = x.reshape(N, -1).astype(jnp.float32)
    mean = xf.mean(axis=1)
    std = jnp.sqrt(jnp.sum((xf - mean[:, None]) ** 2, axis=1) / (xf.shape[1] - 1))
    shape = (N,) + (1,) * (x.ndim - 1)
    y = (x - mean.reshape(shape)) / (std.reshape(shape) + eps)
    ashape = (1, -1) + (1,) * (x.ndim - 2)
    return y * gamma.reshape(ashape) + beta.reshape(ashape)


if __name__ == "__main__":
    key = jax.random.PRNGKey(0)
    kx, kg = jax.random.split(key)

    N, C, H, W = 2, 4, 16, 16
    x = jax.random.normal(kx, (N, C, H, W), dtype=jnp.float32)

    # deterministic parameter init (mirrors nn.Parameter(Tensor(C).uniform_()),
    # nn.Parameter(torch.zeros(C)))
    gamma = jax.random.uniform(kg, (C,), dtype=jnp.float32)
    beta = jnp.zeros((C,), dtype=jnp.float32)

    out = layer_norm(x, gamma, beta, eps=1e-5)
    out = jax.block_until_ready(out)

    ref = layer_norm_ref(x, gamma, beta, eps=1e-5)
    assert jnp.allclose(out, ref, atol=2e-5, rtol=2e-5), "mismatch vs reference"

    print("KERNEL_OK")
</pallas_src>

<mosaic_0001>
module attributes {stable_mosaic.version = 11 : i64} {
  func.func @_layernorm_kernel(%arg0: i32, %arg1: memref<8x1024xf32, #tpu.memory_space<vmem>>, %arg2: memref<1x1024xf32, #tpu.memory_space<vmem>>, %arg3: memref<1x1024xf32, #tpu.memory_space<vmem>>, %arg4: memref<8x1024xf32, #tpu.memory_space<vmem>>) attributes {dimension_semantics = [#tpu.dimension_semantics<parallel>], iteration_bounds = array<i64: 1>, scalar_prefetch = 0 : i64, scratch_operands = 0 : i64, tpu.core_type = #tpu.core_type<tc>, window_params = [{transform_indices = @transform_0, window_bounds = array<i64: 8, 1024>}, {pipeline_mode = #tpu.pipeline_mode<synchronous>, transform_indices = @transform_1, window_bounds = array<i64: 1, 1024>}, {pipeline_mode = #tpu.pipeline_mode<synchronous>, transform_indices = @transform_2, window_bounds = array<i64: 1, 1024>}, {transform_indices = @transform_3, window_bounds = array<i64: 8, 1024>}]} {
    %c0 = arith.constant 0 : index
    %c0_0 = arith.constant 0 : index
    %0 = vector.load %arg1[%c0, %c0_0] : memref<8x1024xf32, #tpu.memory_space<vmem>>, vector<8x1024xf32>
    %cst = arith.constant dense<0.000000e+00> : vector<8xf32>
    %1 = vector.multi_reduction <add>, %0, %cst [1] : vector<8x1024xf32> to vector<8xf32>
    %2 = vector.shape_cast %1 : vector<8xf32> to vector<8x1xf32>
    %cst_1 = arith.constant 9.765625E-4 : f32
    %3 = vector.broadcast %cst_1 : f32 to vector<8x1xf32>
    %4 = arith.mulf %2, %3 : vector<8x1xf32>
    %5 = vector.broadcast %4 : vector<8x1xf32> to vector<8x1024xf32>
    %6 = arith.subf %0, %5 : vector<8x1024xf32>
    %7 = arith.mulf %6, %6 : vector<8x1024xf32>
    %cst_2 = arith.constant dense<0.000000e+00> : vector<8xf32>
    %8 = vector.multi_reduction <add>, %7, %cst_2 [1] : vector<8x1024xf32> to vector<8xf32>
    %9 = vector.shape_cast %8 : vector<8xf32> to vector<8x1xf32>
    %cst_3 = arith.constant 9.77517105E-4 : f32
    %10 = vector.broadcast %cst_3 : f32 to vector<8x1xf32>
    %11 = arith.mulf %9, %10 : vector<8x1xf32>
    %cst_4 = arith.constant 0.000000e+00 : f32
    %12 = vector.broadcast %cst_4 : f32 to vector<8x1xf32>
    %13 = arith.maximumf %11, %12 : vector<8x1xf32>
    %14 = math.sqrt %13 : vector<8x1xf32>
    %cst_5 = arith.constant 9.99999974E-6 : f32
    %15 = vector.broadcast %cst_5 : f32 to vector<8x1xf32>
    %16 = arith.addf %14, %15 : vector<8x1xf32>
    %17 = tpu.reciprocal %16 : vector<8x1xf32> -> vector<8x1xf32>
    %c0_6 = arith.constant 0 : index
    %c0_7 = arith.constant 0 : index
    %18 = vector.load %arg2[%c0_6, %c0_7] : memref<1x1024xf32, #tpu.memory_space<vmem>>, vector<1x1024xf32>
    %c0_8 = arith.constant 0 : index
    %c0_9 = arith.constant 0 : index
    %19 = vector.load %arg3[%c0_8, %c0_9] : memref<1x1024xf32, #tpu.memory_space<vmem>>, vector<1x1024xf32>
    %20 = vector.broadcast %17 : vector<8x1xf32> to vector<8x1024xf32>
    %21 = arith.mulf %6, %20 : vector<8x1024xf32>
    %22 = vector.broadcast %18 : vector<1x1024xf32> to vector<8x1024xf32>
    %23 = arith.mulf %21, %22 : vector<8x1024xf32>
    %24 = vector.broadcast %19 : vector<1x1024xf32> to vector<8x1024xf32>
    %25 = arith.addf %23, %24 : vector<8x1024xf32>
    %c0_10 = arith.constant 0 : index
    %c0_11 = arith.constant 0 : index
    %26 = vector.load %arg4[%c0_10, %c0_11] : memref<8x1024xf32, #tpu.memory_space<vmem>>, vector<8x1024xf32>
    tpu.vector_store %arg4[%c0_10, %c0_11], %25 {strides = array<i32>} : memref<8x1024xf32, #tpu.memory_space<vmem>>, vector<8x1024xf32>,
    return
  }
  func.func @transform_0(%arg0: i32) -> (i32, i32) {
    %c0_i32 = arith.constant 0 : i32
    %c0_i32_0 = arith.constant 0 : i32
    return %arg0, %c0_i32 : i32, i32
  }
  func.func @transform_1(%arg0: i32) -> (i32, i32) {
    %c0_i32 = arith.constant 0 : i32
    %c0_i32_0 = arith.constant 0 : i32
    %c0_i32_1 = arith.constant 0 : i32
    return %c0_i32, %c0_i32_0 : i32, i32
  }
  func.func @transform_2(%arg0: i32) -> (i32, i32) {
    %c0_i32 = arith.constant 0 : i32
    %c0_i32_0 = arith.constant 0 : i32
    %c0_i32_1 = arith.constant 0 : i32
    return %c0_i32, %c0_i32_0 : i32, i32
  }
  func.func @transform_3(%arg0: i32) -> (i32, i32) {
    %c0_i32 = arith.constant 0 : i32
    %c0_i32_0 = arith.constant 0 : i32
    return %arg0, %c0_i32 : i32, i32
  }
}

</mosaic_0001>

<llo_original>
// kernel: tpu_custom_call.1
$region0: #{tpu_custom_call.1}
  #allocation0 [shape = 'u32[]', space=smem, size = 0x4, offset = 0x4, fixed_abs, tag = 'smem constant byte address 0x4 - core index']
  #allocation1 [shape = 'u32[144,128]{1,0:T(1,128)}', space=vmem, size = 0x12000, scoped, tag = 'internal scratch']
  %s0 = inlined_call_operand.hbm [shape: f32[8,1024], index: 0, kind: input, shape index: {}]
  %s1 = inlined_call_operand.hbm [shape: f32[1,1024], index: 1, kind: input, shape index: {}]
  %s2 = inlined_call_operand.hbm [shape: f32[1,1024], index: 2, kind: input, shape index: {}]
  %s3 = inlined_call_operand.hbm [shape: f32[8,1024], index: 3, kind: output, shape index: {}]
  %s4 = sld [smem:[#allocation0]]
  $region34: #{tpu_custom_call.1} parent=0
    _
  %s6 = ssub.s32 1, %s4
  %s7 = scalar_select 0, %s6, %s4
  $region1: #{tpu_custom_call.1} parent=0
    #allocation2 [shape = 'u8[32768]{0}', space=vmem, size = 0x8000, scoped, tag = 'input window, operand 0, single buffered']
    #allocation3 [shape = 's32[1]{0}', space=sflag, size = 0x4, scoped, tag = 'scoped memory for tpu_custom_call.1']
    #allocation4 [shape = 's32[1]{0}', space=sflag, size = 0x4, scoped, tag = 'scoped memory for tpu_custom_call.1']
    #allocation5 [shape = 'u8[4096]{0}', space=vmem, size = 0x1000, scoped, tag = 'input window, operand 1, single buffered']
    #allocation6 [shape = 's32[1]{0}', space=sflag, size = 0x4, scoped, tag = 'scoped memory for tpu_custom_call.1']
    #allocation7 [shape = 'u8[4096]{0}', space=vmem, size = 0x1000, scoped, tag = 'input window, operand 2, single buffered']
    #allocation8 [shape = 'u8[32768]{0}', space=vmem, size = 0x8000, scoped, tag = 'output window, operand 0, single buffered']
    %8 = vsyncpa [#allocation3], 0
    %9 = vsyncpa [#allocation6], 0
    %10 = vsyncpa [#allocation4], 0
    // Predicated region
    $region2: #{tpu_custom_call.1} parent=1 // pred_check
      _
    $region3: #{tpu_custom_call.1} parent=1 // pred_check_branch
      %12 = sbr.rel (0) target = $region5
    $region4: #{tpu_custom_call.1} parent=1 // pred_region
      %s14 = ssub.s32 1024, 1024
      %15 = vsyncadd [#allocation3], %s14
      %s17 = sshll.u32 [#allocation2], 4
      %s18 = int_to_ptr.vmem [resolvable:$true] %s17
      %20 = dma.hbm_to_vmem [thread:$0]  %s0, 1024, %s18, [#allocation3]
    $region5: #{tpu_custom_call.1} parent=1 // pred_fallthru
      _
    // Predicated region
    $region6: #{tpu_custom_call.1} parent=1 // pred_check
      _
    $region7: #{tpu_custom_call.1} parent=1 // pred_check_branch
      %22 = sbr.rel (0) target = $region9
    $region8: #{tpu_custom_call.1} parent=1 // pred_region
      %s24 = ssub.s32 128, 128
      %25 = vsyncadd [#allocation6], %s24
      %s27 = sshll.u32 [#allocation5], 4
      %s28 = int_to_ptr.vmem [resolvable:$true] %s27
      %30 = dma.hbm_to_vmem [thread:$0]  %s1, 128, %s28, [#allocation6]
    $region9: #{tpu_custom_call.1} parent=1 // pred_fallthru
      _
    // Predicated region
    $region10: #{tpu_custom_call.1} parent=1 // pred_check
      _
    $region11: #{tpu_custom_call.1} parent=1 // pred_check_branch
      %32 = sbr.rel (0) target = $region13
    $region12: #{tpu_custom_call.1} parent=1 // pred_region
      %s34 = ssub.s32 128, 128
      %35 = vsyncadd [#allocation6], %s34
      %s37 = sshll.u32 [#allocation7], 4
      %s38 = int_to_ptr.vmem [resolvable:$true] %s37
      %40 = dma.hbm_to_vmem [thread:$0]  %s2, 128, %s38, [#allocation6]
    $region13: #{tpu_custom_call.1} parent=1 // pred_fallthru
      _
    // Predicated region
    $region14: #{tpu_custom_call.1} parent=1 // pred_check
      _
    $region15: #{tpu_custom_call.1} parent=1 // pred_check_branch
      %42 = sbr.rel (0) target = $region17
    $region16: #{tpu_custom_call.1} parent=1 // pred_region
      %43 = dma.done [#allocation3], 1024
    $region17: #{tpu_custom_call.1} parent=1 // pred_fallthru
      _
    // Predicated region
    $region18: #{tpu_custom_call.1} parent=1 // pred_check
      _
    $region19: #{tpu_custom_call.1} parent=1 // pred_check_branch
      %45 = sbr.rel (0) target = $region21
    $region20: #{tpu_custom_call.1} parent=1 // pred_region
      %46 = dma.done [#allocation6], 128
    $region21: #{tpu_custom_call.1} parent=1 // pred_fallthru
      _
    // Predicated region
    $region22: #{tpu_custom_call.1} parent=1 // pred_check
      _
    $region23: #{tpu_custom_call.1} parent=1 // pred_check_branch
      %48 = sbr.rel (0) target = $region25
    $region24: #{tpu_custom_call.1} parent=1 // pred_region
      %49 = dma.done [#allocation6], 128
    $region25: #{tpu_custom_call.1} parent=1 // pred_fallthru
      _
    %v50 = vld [vmem:[#allocation2] sm:$0xff]
    %v51 = vld [vmem:[#allocation2 + $0x8] sm:$0xff]
    %v52 = vld [vmem:[#allocation2 + $0x10] sm:$0xff]
    %v53 = vld [vmem:[#allocation2 + $0x18] sm:$0xff]
    %v54 = vld [vmem:[#allocation2 + $0x20] sm:$0xff]
    %v55 = vld [vmem:[#allocation2 + $0x28] sm:$0xff]
    %v56 = vld [vmem:[#allocation2 + $0x30] sm:$0xff]
    %v57 = vld [vmem:[#allocation2 + $0x38] sm:$0xff]
    %v58 = vadd.f32 %v50, %v51
    %v59 = vadd.f32 %v58, %v52
    %v60 = vadd.f32 %v59, %v53
    %v61 = vadd.f32 %v60, %v54
    %v62 = vadd.f32 %v61, %v55
    %v63 = vadd.f32 %v62, %v56
    %v64 = vadd.f32 %v63, %v57
    %65 = vadd.xlane.f32.xlu0 %v64
    %v66 = vpop.xlane.xlu0 %65
    %v67 = vmul.f32 %v66, 0.0009765625
    %v68 = vsub.f32 %v50, %v67
    %v69 = vsub.f32 %v51, %v67
    %v70 = vsub.f32 %v52, %v67
    %v71 = vsub.f32 %v53, %v67
    %v72 = vsub.f32 %v54, %v67
    %v73 = vsub.f32 %v55, %v67
    %v74 = vsub.f32 %v56, %v67
    %v75 = vsub.f32 %v57, %v67
    %v76 = vmul.f32 %v68, %v68
    %v77 = vmul.f32 %v69, %v69
    %v78 = vmul.f32 %v70, %v70
    %v79 = vmul.f32 %v71, %v71
    %v80 = vmul.f32 %v72, %v72
    %v81 = vmul.f32 %v73, %v73
    %v82 = vmul.f32 %v74, %v74
    %v83 = vmul.f32 %v75, %v75
    %v84 = vadd.f32 %v76, %v77
    %v85 = vadd.f32 %v84, %v78
    %v86 = vadd.f32 %v85, %v79
    %v87 = vadd.f32 %v86, %v80
    %v88 = vadd.f32 %v87, %v81
    %v89 = vadd.f32 %v88, %v82
    %v90 = vadd.f32 %v89, %v83
    %91 = vadd.xlane.f32.xlu0 %v90
    %v92 = vpop.xlane.xlu0 %91
    %v93 = vmul.f32 %v92, 0.0009775171
    %v94 = vmax.f32 %v93, 0.0
    %v95 = vrsqrt.pop %v94
    %v96 = vmul.f32 %v94, %v95
    %vm97 = vcmp.eq.f32.partialorder %v94, inf
    %v98 = vsel %vm97, %v94, %v96
    %vm99 = vcmp.eq.f32.partialorder %v94, 0.0
    %v100 = vand.u32 %v94, 2147483648
    %v101 = vsel %vm99, %v100, %v98
    %v102 = vadd.f32 %v101, 1e-05
    %v103 = vrcp.pop %v102
    %v104 = vld [vmem:[#allocation5] sm:$0xff]
    %v105 = vld [vmem:[#allocation7] sm:$0xff]
    %v106 = vmul.f32 %v68, %v103
    %v107 = vmul.f32 %v69, %v103
    %v108 = vmul.f32 %v70, %v103
    %v109 = vmul.f32 %v71, %v103
    %v110 = vmul.f32 %v72, %v103
    %v111 = vmul.f32 %v73, %v103
    %v112 = vmul.f32 %v74, %v103
    %v113 = vmul.f32 %v75, %v103
    %v115 = vlaneseq
    %v116 = vshrl.u32 %v115, 7
    %v117 = vsub.s32 0, %v116
    %v118 = vrot.slane %v104, %v117
    %v119 = vlaneseq
    %v120 = vshrl.u32 %v119, 7
    %v121 = vsub.s32 1, %v120
    %v122 = vrot.slane %v104, %v121
    %v123 = vlaneseq
    %v124 = vshrl.u32 %v123, 7
    %v125 = vsub.s32 2, %v124
    %v126 = vrot.slane %v104, %v125
    %v127 = vlaneseq
    %v128 = vshrl.u32 %v127, 7
    %v129 = vsub.s32 3, %v128
    %v130 = vrot.slane %v104, %v129
    %v131 = vlaneseq
    %v132 = vshrl.u32 %v131, 7
    %v133 = vsub.s32 4, %v132
    %v134 = vrot.slane %v104, %v133
    %v135 = vlaneseq
    %v136 = vshrl.u32 %v135, 7
    %v137 = vsub.s32 5, %v136
    %v138 = vrot.slane %v104, %v137
    %v139 = vlaneseq
    %v140 = vshrl.u32 %v139, 7
    %v141 = vsub.s32 6, %v140
    %v142 = vrot.slane %v104, %v141
    %v143 = vlaneseq
    %v144 = vshrl.u32 %v143, 7
    %v145 = vsub.s32 7, %v144
    %v146 = vrot.slane %v104, %v145
    %v155 = vmul.f32 %v106, %v118
    %v156 = vmul.f32 %v107, %v122
    %v157 = vmul.f32 %v108, %v126
    %v158 = vmul.f32 %v109, %v130
    %v159 = vmul.f32 %v110, %v134
    %v160 = vmul.f32 %v111, %v138
    %v161 = vmul.f32 %v112, %v142
    %v162 = vmul.f32 %v113, %v146
    %v164 = vlaneseq
    %v165 = vshrl.u32 %v164, 7
    %v166 = vsub.s32 0, %v165
    %v167 = vrot.slane %v105, %v166
    %v168 = vlaneseq
    %v169 = vshrl.u32 %v168, 7
    %v170 = vsub.s32 1, %v169
    %v171 = vrot.slane %v105, %v170
    %v172 = vlaneseq
    %v173 = vshrl.u32 %v172, 7
    %v174 = vsub.s32 2, %v173
    %v175 = vrot.slane %v105, %v174
    %v176 = vlaneseq
    %v177 = vshrl.u32 %v176, 7
    %v178 = vsub.s32 3, %v177
    %v179 = vrot.slane %v105, %v178
    %v180 = vlaneseq
    %v181 = vshrl.u32 %v180, 7
    %v182 = vsub.s32 4, %v181
    %v183 = vrot.slane %v105, %v182
    %v184 = vlaneseq
    %v185 = vshrl.u32 %v184, 7
    %v186 = vsub.s32 5, %v185
    %v187 = vrot.slane %v105, %v186
    %v188 = vlaneseq
    %v189 = vshrl.u32 %v188, 7
    %v190 = vsub.s32 6, %v189
    %v191 = vrot.slane %v105, %v190
    %v192 = vlaneseq
    %v193 = vshrl.u32 %v192, 7
    %v194 = vsub.s32 7, %v193
    %v195 = vrot.slane %v105, %v194
    %v204 = vadd.f32 %v155, %v167
    %v205 = vadd.f32 %v156, %v171
    %v206 = vadd.f32 %v157, %v175
    %v207 = vadd.f32 %v158, %v179
    %v208 = vadd.f32 %v159, %v183
    %v209 = vadd.f32 %v160, %v187
    %v210 = vadd.f32 %v161, %v191
    %v211 = vadd.f32 %v162, %v195
    %212 = vst [vmem:[#allocation8] sm:$0xff] %v204
    %213 = vst [vmem:[#allocation8 + $0x8] sm:$0xff] %v205
    %214 = vst [vmem:[#allocation8 + $0x10] sm:$0xff] %v206
    %215 = vst [vmem:[#allocation8 + $0x18] sm:$0xff] %v207
    %216 = vst [vmem:[#allocation8 + $0x20] sm:$0xff] %v208
    %217 = vst [vmem:[#allocation8 + $0x28] sm:$0xff] %v209
    %218 = vst [vmem:[#allocation8 + $0x30] sm:$0xff] %v210
    %219 = vst [vmem:[#allocation8 + $0x38] sm:$0xff] %v211
    // Predicated region
    $region26: #{tpu_custom_call.1} parent=1 // pred_check
      _
    $region27: #{tpu_custom_call.1} parent=1 // pred_check_branch
      %221 = sbr.rel (0) target = $region29
    $region28: #{tpu_custom_call.1} parent=1 // pred_region
      %s223 = ssub.s32 1024, 1024
      %224 = vsyncadd [#allocation4], %s223
      %s226 = sshll.u32 [#allocation8], 4
      %s227 = int_to_ptr.vmem [resolvable:$true] %s226
      %229 = dma.vmem_to_hbm [thread:$0]  %s227, 1024, %s3, [#allocation4]
    $region29: #{tpu_custom_call.1} parent=1 // pred_fallthru
      _
    // Predicated region
    $region30: #{tpu_custom_call.1} parent=1 // pred_check
      _
    $region31: #{tpu_custom_call.1} parent=1 // pred_check_branch
      %231 = sbr.rel (0) target = $region33
    $region32: #{tpu_custom_call.1} parent=1 // pred_region
      %232 = dma.done [#allocation4], 1024
    $region33: #{tpu_custom_call.1} parent=1 // pred_fallthru
      _
    %233 = vsyncpa [#allocation3], 1
    %234 = vsyncpa [#allocation6], 1
    %235 = vsyncpa [#allocation4], 1

</llo_original>
